<compile_context>
chip_gen: v5e
topology: v5e:2x2
jax: 0.10.0
libtpu: 0.0.40
codegen_flags: <defaults>
</compile_context>

<pallas_src>
import math

import jax
import jax.numpy as jnp
from jax.experimental import pallas as pl
from jax.experimental.pallas import tpu as pltpu


def _copy_kernel(x_ref, o_ref):
    # Pure data movement: copy one lane-dense tile.
    o_ref[...] = x_ref[...]


def _round_down(v, m):
    return (v // m) * m


def _vmem_capacity_bytes():
    try:
        info = pltpu.get_tpu_info()
        return int(getattr(info, "vmem_capacity_bytes", 64 << 20))
    except Exception:
        return 64 << 20  # conservative: v7x per-TC VMEM


def _materialized_copy(xf, n, f):
    """Copy the flattened (n, f) array through a Pallas kernel."""
    total = n * f
    itemsize = jnp.dtype(xf.dtype).itemsize
    sub = 8 * max(1, 4 // itemsize)      # sublane multiple: 8 f32, 16 bf16, 32 i8
    lane = 128

    vmem_cap = _vmem_capacity_bytes()
    max_block_bytes = max(1 << 20, vmem_cap // 8)    # ~8 MiB v7x, ~16 MiB v5e/v6e
    max_block_elems = max(sub * lane, max_block_bytes // itemsize)

    # --- choose the 2-D view the copy runs on --------------------------------
    if total % (sub * lane) == 0:
        # Flat lane+sublane-dense view (R, C): C a large multiple of 128 so
        # every DMA row is a long contiguous segment and every store is an
        # unmasked full-vreg vst, independent of the batch size.
        col_cap = max(lane, min(4096, _round_down(max_block_elems // sub, lane)))
        C = lane
        c = col_cap
        while c >= lane:
            if total % c == 0 and (total // c) % sub == 0:
                C = c
                break
            c -= lane
        R = total // C
        arr = xf.reshape(R, C)           # metadata-only
    else:
        # Ragged element count: copy the (n, f) view; cdiv grid masks edges.
        R, C = n, f
        arr = xf

    # --- tile sizes -----------------------------------------------------------
    if C <= lane:
        tc = C                           # full dim (may be < 128)
    else:
        tc = max(lane, min(_round_down(C, lane), 4096,
                           _round_down(max_block_elems // sub, lane)))
    if R <= sub:
        tr = R                           # full dim (may be < 8)
    else:
        cap_rows = max(sub, _round_down(max_block_elems // tc, sub))
        tr = max(sub, min(_round_down(R, sub), cap_rows))

    # --- guarantee >= 2 blocks so v7x megacore can use both TensorCores -------
    if pl.cdiv(R, tr) * pl.cdiv(C, tc) == 1:
        if tc >= 2 * lane:
            tc = _round_down(tc // 2, lane)
        elif tr >= 2 * sub:
            tr = _round_down(tr // 2, sub)

    grid = (pl.cdiv(R, tr), pl.cdiv(C, tc))
    block_bytes = tr * tc * itemsize
    # Double-buffered input + output = 4 blocks, plus headroom; stays well
    # inside this generation's physical VMEM (64 MiB v7x / 128 MiB v5e,v6e).
    vmem_limit = int(max(16 << 20,
                         min(int(0.6 * vmem_cap), 4 * block_bytes + (1 << 20))))

    out = pl.pallas_call(
        _copy_kernel,
        out_shape=jax.ShapeDtypeStruct((R, C), arr.dtype),
        grid_spec=pltpu.PrefetchScalarGridSpec(
            num_scalar_prefetch=0,
            grid=grid,
            in_specs=[pl.BlockSpec((tr, tc), lambda i, j: (i, j))],
            out_specs=pl.BlockSpec((tr, tc), lambda i, j: (i, j)),
        ),
        compiler_params=pltpu.CompilerParams(
            dimension_semantics=("parallel", "parallel"),
            vmem_limit_bytes=vmem_limit,
        ),
        cost_estimate=pl.CostEstimate(
            flops=0,
            transcendentals=0,
            bytes_accessed=2 * total * itemsize,
        ),
    )(arr)

    return out.reshape(n, f)             # metadata-only


def flatten(x, *, materialize=False):
    """Pallas equivalent of torch `x.view(x.shape[0], -1)`.

    Default: metadata-only reshape (zero HBM traffic), exactly torch's .view.
    materialize=True forces a fresh buffer produced by the Pallas copy kernel.
    """
    n = x.shape[0]
    f = math.prod(x.shape[1:]) if x.ndim > 1 else 1
    xf = x.reshape(n, f)
    if not materialize or n * f == 0:
        return xf
    return _materialized_copy(xf, n, f)


if __name__ == "__main__":
    key = jax.random.PRNGKey(0)
    # Small NCHW input: batch=2, channels=4, spatial=16x16
    x = jax.random.normal(key, (2, 4, 16, 16), dtype=jnp.float32)

    # Reference semantics: x.view(N, -1)
    ref = x.reshape(x.shape[0], -1)

    # Default path: metadata-only reshape (what production code should use).
    y0 = jax.block_until_ready(flatten(x))
    assert y0.shape == ref.shape and y0.dtype == ref.dtype
    assert jnp.array_equal(y0, ref)

    # Materialized path: exercises the Pallas copy kernel once.
    y1 = jax.block_until_ready(flatten(x, materialize=True))
    assert y1.shape == ref.shape and y1.dtype == ref.dtype
    assert jnp.array_equal(y1, ref)

    print("KERNEL_OK")
</pallas_src>

<mosaic_0001>
module attributes {stable_mosaic.version = 11 : i64} {
  func.func @_copy_kernel(%arg0: i32, %arg1: i32, %arg2: memref<8x128xf32, #tpu.memory_space<vmem>>, %arg3: memref<8x128xf32, #tpu.memory_space<vmem>>) attributes {dimension_semantics = [#tpu.dimension_semantics<parallel>, #tpu.dimension_semantics<parallel>], iteration_bounds = array<i64: 1, 2>, scalar_prefetch = 0 : i64, scratch_operands = 0 : i64, tpu.core_type = #tpu.core_type<tc>, window_params = [{transform_indices = @transform_0, window_bounds = array<i64: 8, 128>}, {transform_indices = @transform_1, window_bounds = array<i64: 8, 128>}]} {
    %c0 = arith.constant 0 : index
    %c0_0 = arith.constant 0 : index
    %0 = vector.load %arg2[%c0, %c0_0] : memref<8x128xf32, #tpu.memory_space<vmem>>, vector<8x128xf32>
    %c0_1 = arith.constant 0 : index
    %c0_2 = arith.constant 0 : index
    %1 = vector.load %arg3[%c0_1, %c0_2] : memref<8x128xf32, #tpu.memory_space<vmem>>, vector<8x128xf32>
    tpu.vector_store %arg3[%c0_1, %c0_2], %0 {strides = array<i32>} : memref<8x128xf32, #tpu.memory_space<vmem>>, vector<8x128xf32>,
    return
  }
  func.func @transform_0(%arg0: i32, %arg1: i32) -> (i32, i32) {
    %c0_i32 = arith.constant 0 : i32
    return %arg0, %arg1 : i32, i32
  }
  func.func @transform_1(%arg0: i32, %arg1: i32) -> (i32, i32) {
    %c0_i32 = arith.constant 0 : i32
    return %arg0, %arg1 : i32, i32
  }
}

</mosaic_0001>

<llo_original>
// kernel: tpu_custom_call.1
$region0: #{tpu_custom_call.1}
  #allocation0 [shape = 'u32[]', space=smem, size = 0x4, offset = 0x4, fixed_abs, tag = 'smem constant byte address 0x4 - core index']
  #allocation1 [shape = 'u32[72,128]{1,0:T(1,128)}', space=vmem, size = 0x9000, scoped, tag = 'internal scratch']
  %s0 = inlined_call_operand.hbm [shape: f32[8,256], index: 0, kind: input, shape index: {}]
  %s1 = inlined_call_operand.hbm [shape: f32[8,256], index: 1, kind: output, shape index: {}]
  %s2 = sld [smem:[#allocation0]]
  $region41: #{tpu_custom_call.1} parent=0
    _
  %s4 = ssub.s32 1, %s2
  %s5 = scalar_select 0, %s4, %s2
  $region1: #{tpu_custom_call.1} parent=0
    #allocation2 [shape = 'u8[8192]{0}', space=vmem, size = 0x2000, scoped, tag = 'input window, operand 0']
    #allocation3 [shape = 's32[2]{0}', space=sflag, size = 0x8, scoped, tag = 'scoped memory for tpu_custom_call.1']
    #allocation4 [shape = 's32[2]{0}', space=sflag, size = 0x8, scoped, tag = 'scoped memory for tpu_custom_call.1']
    #allocation5 [shape = 'u8[8192]{0}', space=vmem, size = 0x2000, scoped, tag = 'output window, operand 0']
    %6 = vsyncpa [#allocation3], 0
    %s7 = scalar_lea.sflag [#allocation3], 1
    %8 = vsyncpa %s7, 0
    %9 = vsyncpa [#allocation4], 0
    %s10 = scalar_lea.sflag [#allocation4], 1
    %11 = vsyncpa %s10, 0
    loop: start=0, step=1, limit=4
    $region2: #{tpu_custom_call.1} parent=1 // loop_pre_header
      _
    $region3: #{tpu_custom_call.1} parent=1 // loop_header
      %s13 = sphi 0, %s17
      %p14 = scmp.ge.s32.totalorder %s13, 4
      %s20 = sphi 0, %s32
      %s21 = sphi 0, %s28
      %s22 = sphi 0, %s20
      %s23 = sphi 0, %s21
      %s24 = sphi 0, %s22
      %s25 = sphi 0, %s23
      %s37 = sphi 0, %s39
      %s40 = sphi 0, %s37
      %s41 = sphi 0, %s40
      %s57 = sphi 0, %s41
      %s65 = sphi 0, %s67
      %s68 = sphi 0, %s65
      %s69 = sphi 0, %s68
      %s85 = sphi 0, %s69
    $region4: #{tpu_custom_call.1} parent=1 // loop_header_branch
      %16 = sbr.rel (%p14) target = $region8
    $region5: #{tpu_custom_call.1} parent=1 // loop_body
      %s18 = ssub.s32 %s13, 1
      %s19 = ssub.s32 %s13, 2
      %s26 = sadd.s32 1, %s21
      %p27 = scmp.ge.s32.totalorder %s26, 2
      %s28 = scalar_select %p27, 0, %s26
      %s29 = sadd.s32 1, %s20
      %s30 = scalar_select %p27, %s29, %s20
      %p31 = scmp.ge.s32.totalorder %s30, 1
      %s32 = scalar_select %p31, 0, %s30
      %s33 = ssub.s32 %s20, %s32
      %s34 = ssub.s32 %s21, %s28
      %s35 = sor.u32 %s33, %s34
      %p36 = scmp.eq.s32.totalorder %s35, 0
      %s38 = sadd.s32 %s37, 1
      %s39 = scalar_select %p36, %s37, %s38
      %p42 = pneg %p36
      %p43 = scmp.eq.s32.totalorder %s13, 1
      %p44 = por %p42, %p43
      %p45 = scmp.ne.s32.totalorder %s37, %s40
      %p46 = scmp.eq.s32.totalorder %s13, 0
      %p47 = por %p45, %p46
      %p48 = scmp.ne.s32.totalorder %s37, %s40
      %p49 = scmp.eq.s32.totalorder %s18, 1
      %p50 = por %p48, %p49
      %p51 = scmp.ne.s32.totalorder %s40, %s41
      %p52 = scmp.eq.s32.totalorder %s18, 0
      %p53 = por %p51, %p52
      %p54 = scmp.ne.s32.totalorder %s40, %s41
      %p55 = scmp.eq.s32.totalorder %s19, 1
      %p56 = por %p54, %p55
      %p58 = scmp.ne.s32.totalorder %s41, %s57
      %p59 = scmp.eq.s32.totalorder %s19, 0
      %p60 = por %p58, %p59
      %s61 = ssub.s32 %s20, %s32
      %s62 = ssub.s32 %s21, %s28
      %s63 = sor.u32 %s61, %s62
      %p64 = scmp.eq.s32.totalorder %s63, 0
      %s66 = sadd.s32 %s65, 1
      %s67 = scalar_select %p64, %s65, %s66
      %p70 = pneg %p64
      %p71 = scmp.eq.s32.totalorder %s13, 1
      %p72 = por %p70, %p71
      %p73 = scmp.ne.s32.totalorder %s65, %s68
      %p74 = scmp.eq.s32.totalorder %s13, 0
      %p75 = por %p73, %p74
      %p76 = scmp.ne.s32.totalorder %s65, %s68
      %p77 = scmp.eq.s32.totalorder %s18, 1
      %p78 = por %p76, %p77
      %p79 = scmp.ne.s32.totalorder %s68, %s69
      %p80 = scmp.eq.s32.totalorder %s18, 0
      %p81 = por %p79, %p80
      %p82 = scmp.ne.s32.totalorder %s68, %s69
      %p83 = scmp.eq.s32.totalorder %s19, 1
      %p84 = por %p82, %p83
      %p86 = scmp.ne.s32.totalorder %s69, %s85
      %p87 = scmp.eq.s32.totalorder %s19, 0
      %p88 = por %p86, %p87
      %p89 = scmp.le.s32.totalorder 1, %s13
      %p90 = scmp.lt.s32.totalorder %s13, 3
      %p91 = pnand %p89, %p90
      %p92 = pneg %p91
      // Predicated region
      $region9: #{tpu_custom_call.1} parent=5 // pred_check
        _
      $region10: #{tpu_custom_call.1} parent=5 // pred_check_branch
        %94 = sbr.rel (%p91) target = $region12
      $region11: #{tpu_custom_call.1} parent=5 // pred_region
        %s95 = ssub.s32 %s13, 1
      $region12: #{tpu_custom_call.1} parent=5 // pred_fallthru
        _
      %p96 = scmp.lt.s32.totalorder %s13, 2
      // Predicated region
      $region13: #{tpu_custom_call.1} parent=5 // pred_check
        %p97 = pneg %p96
      $region14: #{tpu_custom_call.1} parent=5 // pred_check_branch
        %99 = sbr.rel (%p97) target = $region16
      $region15: #{tpu_custom_call.1} parent=5 // pred_region
        // Predicated region
        $region17: #{tpu_custom_call.1} parent=15 // pred_check
          %p100 = pneg %p47
        $region18: #{tpu_custom_call.1} parent=15 // pred_check_branch
          %102 = sbr.rel (%p100) target = $region20
        $region19: #{tpu_custom_call.1} parent=15 // pred_region
          %s103 = sand.u32 %s37, 1
          %s104 = scalar_lea.sflag [#allocation3], %s103
          %s105 = sand.u32 %s37, 1
          %s106 = smul.addr %s105, 8
          %s107 = scalar_lea.vmem [#allocation2], %s106
          %109 = vsyncadd %s104, 0
          %s110 = smul.addr %s20, 2
          %s111 = sadd.s32 %s21, %s110
          %s112 = smul.addr %s111, 8
          %s113 = scalar_lea.hbm %s0, %s112
          %s115 = sshll.u32 %s113, 4
          %s116 = int_to_ptr.hbm [resolvable:$true] %s115
          %s117 = sshll.u32 %s107, 4
          %s118 = int_to_ptr.vmem [resolvable:$true] %s117
          %120 = dma.hbm_to_vmem [thread:$0]  %s116, 128, %s118, %s104
        $region20: #{tpu_custom_call.1} parent=15 // pred_fallthru
          _
      $region16: #{tpu_custom_call.1} parent=5 // pred_fallthru
        _
      %p121 = scmp.le.s32.totalorder 1, %s13
      %p122 = scmp.lt.s32.totalorder %s13, 3
      %p123 = pnand %p121, %p122
      %p124 = pneg %p123
      // Predicated region
      $region21: #{tpu_custom_call.1} parent=5 // pred_check
        _
      $region22: #{tpu_custom_call.1} parent=5 // pred_check_branch
        %126 = sbr.rel (%p123) target = $region24
      $region23: #{tpu_custom_call.1} parent=5 // pred_region
        %s127 = ssub.s32 %s13, 1
        %s128 = sand.u32 %s40, 1
        %s129 = scalar_lea.sflag [#allocation3], %s128
        %s130 = sand.u32 %s40, 1
        %s131 = smul.addr %s130, 8
        %s132 = scalar_lea.vmem [#allocation2], %s131
        // Predicated region
        $region25: #{tpu_custom_call.1} parent=23 // pred_check
          %p133 = pneg %p53
        $region26: #{tpu_custom_call.1} parent=23 // pred_check_branch
          %135 = sbr.rel (%p133) target = $region28
        $region27: #{tpu_custom_call.1} parent=23 // pred_region
          %137 = dma.done %s129, 128
        $region28: #{tpu_custom_call.1} parent=23 // pred_fallthru
          _
        %s138 = sand.u32 %s40, 1
        %s139 = scalar_lea.sflag [#allocation3], %s138
        %s140 = sand.u32 %s40, 1
        %s141 = smul.addr %s140, 8
        %s142 = scalar_lea.vmem [#allocation2], %s141
        %p143 = pneg %p53
        %p144 = pneg %p50
        %p145 = pneg %p81
        %p146 = pneg %p78
        %s147 = sand.u32 %s68, 1
        %s148 = scalar_lea.sflag [#allocation4], %s147
        %s149 = sand.u32 %s68, 1
        %s150 = smul.addr %s149, 8
        %s151 = scalar_lea.vmem [#allocation5], %s150
        %v152 = vld [vmem:[%s132] sm:$0xff]
        %153 = vst [vmem:[%s151] sm:$0xff] %v152
        %s154 = sand.u32 %s68, 1
        %s155 = scalar_lea.sflag [#allocation4], %s154
        %s156 = sand.u32 %s68, 1
        %s157 = smul.addr %s156, 8
        %s158 = scalar_lea.vmem [#allocation5], %s157
        // Predicated region
        $region29: #{tpu_custom_call.1} parent=23 // pred_check
          %p159 = pneg %p78
        $region30: #{tpu_custom_call.1} parent=23 // pred_check_branch
          %161 = sbr.rel (%p159) target = $region32
        $region31: #{tpu_custom_call.1} parent=23 // pred_region
          %163 = vsyncadd %s155, 0
          %s164 = smul.addr %s22, 2
          %s165 = sadd.s32 %s23, %s164
          %s166 = smul.addr %s165, 8
          %s167 = scalar_lea.hbm %s1, %s166
          %s169 = sshll.u32 %s158, 4
          %s170 = int_to_ptr.vmem [resolvable:$true] %s169
          %s171 = sshll.u32 %s167, 4
          %s172 = int_to_ptr.hbm [resolvable:$true] %s171
          %174 = dma.vmem_to_hbm [thread:$0]  %s170, 128, %s172, %s155
        $region32: #{tpu_custom_call.1} parent=23 // pred_fallthru
          _
      $region24: #{tpu_custom_call.1} parent=5 // pred_fallthru
        _
      %p175 = scmp.le.s32.totalorder 2, %s13
      // Predicated region
      $region33: #{tpu_custom_call.1} parent=5 // pred_check
        %p176 = pneg %p175
      $region34: #{tpu_custom_call.1} parent=5 // pred_check_branch
        %178 = sbr.rel (%p176) target = $region36
      $region35: #{tpu_custom_call.1} parent=5 // pred_region
        %s179 = ssub.s32 %s13, 2
        // Predicated region
        $region37: #{tpu_custom_call.1} parent=35 // pred_check
          %p180 = pneg %p84
        $region38: #{tpu_custom_call.1} parent=35 // pred_check_branch
          %182 = sbr.rel (%p180) target = $region40
        $region39: #{tpu_custom_call.1} parent=35 // pred_region
          %s183 = sand.u32 %s69, 1
          %s184 = scalar_lea.sflag [#allocation4], %s183
          %s185 = sand.u32 %s69, 1
          %s186 = smul.addr %s185, 8
          %s187 = scalar_lea.vmem [#allocation5], %s186
          %189 = dma.done %s184, 128
        $region40: #{tpu_custom_call.1} parent=35 // pred_fallthru
          _
      $region36: #{tpu_custom_call.1} parent=5 // pred_fallthru
        _
    $region6: #{tpu_custom_call.1} parent=1 // loop_footer
      %s17 = sadd.s32 1, %s13
    $region7: #{tpu_custom_call.1} parent=1 // loop_footer_branch
      %12 = sbr.rel target = $region3
    $region8: #{tpu_custom_call.1} parent=1 // loop_exit
      _
    %190 = vsyncpa [#allocation3], 1
    %s191 = scalar_lea.sflag [#allocation3], 1
    %192 = vsyncpa %s191, 1
    %193 = vsyncpa [#allocation4], 1
    %s194 = scalar_lea.sflag [#allocation4], 1
    %195 = vsyncpa %s194, 1

</llo_original>
